<compile_context>
chip_gen: v6e
topology: v6e:2x2x1
jax: 0.10.0
libtpu: 0.0.40
codegen_flags: <defaults>
</compile_context>

<pallas_src>
import jax
import jax.numpy as jnp
from jax import lax
from jax.experimental import pallas as pl
from jax.experimental.pallas import tpu as pltpu


def pre_g_kernel(noise_ref, att_ref, w1n_ref, w1a_ref, b1_ref, w2_ref, b2_ref,
                 out_ref):
    """One batch tile, feature-major math (batch on the lane axis).

    noise_ref: (TM, nz)         batch-major input tile
    att_ref  : (TM, attSize)    batch-major input tile
    w1n_ref  : (ngh, nz)        fc1 weight, noise columns (PyTorch (out, in))
    w1a_ref  : (ngh, attSize)   fc1 weight, att columns
    b1_ref   : (ngh, 1)
    w2_ref   : (latent, ngh)
    b2_ref   : (latent, 1)
    out_ref  : (latent, TM)     transposed output -> lane-dense stores
    """
    # fc1 fused with torch.cat:  h^T = W1n @ noise^T + W1a @ att^T + b1
    # Contract on the feature axis of both operands (MXU trans_b form) so the
    # result lands directly as (ngh, TM) with batch on lanes.
    dn_tb = (((1,), (1,)), ((), ()))
    h = lax.dot_general(w1n_ref[...], noise_ref[...], dn_tb,
                        preferred_element_type=jnp.float32)
    h = h + lax.dot_general(w1a_ref[...], att_ref[...], dn_tb,
                            preferred_element_type=jnp.float32)
    h = h + b1_ref[...]                    # (ngh, TM) + (ngh, 1)
    h = jnp.where(h > 0, h, 0.2 * h)       # LeakyReLU(negative_slope=0.2)

    # fc2 + ReLU:  o^T = W2 @ h^T + b2
    o = lax.dot_general(w2_ref[...], h, (((1,), (0,)), ((), ())),
                        preferred_element_type=jnp.float32)
    o = o + b2_ref[...]                    # (latent, TM) + (latent, 1)
    out_ref[...] = jnp.maximum(o, 0.0).astype(out_ref.dtype)


def pre_g_forward(noise, att, w1, b1, w2, b2, *, block_batch=512):
    """PRE_G forward.

    noise: (B, nz)                 att: (B, attSize)
    w1:    (ngh, nz+attSize)       b1:  (ngh,)       (PyTorch nn.Linear layout)
    w2:    (latent_dim, ngh)       b2:  (latent_dim,)
    returns (B, latent_dim)
    """
    B, nz = noise.shape
    att_size = att.shape[1]
    ngh = w1.shape[0]
    latent = w2.shape[0]

    # Split fc1's weight so the torch.cat is fused into the kernel.
    w1n = w1[:, :nz]
    w1a = w1[:, nz:]
    b1c = b1.reshape(ngh, 1)
    b2c = b2.reshape(latent, 1)

    # Batch tile (lane axis of the output): 512 keeps the pipeline well fed on
    # v5e/v6e and comfortably fits v7x's smaller 64 MiB VMEM at these feature
    # sizes. Pad B so the grid divides evenly.
    tm = min(block_batch, B)
    n_tiles = pl.cdiv(B, tm)
    b_pad = n_tiles * tm
    if b_pad != B:
        pad = ((0, b_pad - B), (0, 0))
        noise = jnp.pad(noise, pad)
        att = jnp.pad(att, pad)

    in_dim = nz + att_size
    itemsize = jnp.dtype(noise.dtype).itemsize
    cost = pl.CostEstimate(
        flops=2 * b_pad * (in_dim * ngh + ngh * latent),
        transcendentals=0,
        bytes_accessed=(noise.size + att.size + w1.size + b1.size
                        + w2.size + b2.size + b_pad * latent) * itemsize,
    )

    resident = lambda shape: pl.BlockSpec(shape, lambda i: (0, 0))
    out_t = pl.pallas_call(
        pre_g_kernel,
        out_shape=jax.ShapeDtypeStruct((latent, b_pad), noise.dtype),
        grid=(n_tiles,),
        in_specs=[
            pl.BlockSpec((tm, nz), lambda i: (i, 0)),        # noise tile
            pl.BlockSpec((tm, att_size), lambda i: (i, 0)),  # att tile
            resident((ngh, nz)),                             # W1[:, :nz]
            resident((ngh, att_size)),                       # W1[:, nz:]
            resident((ngh, 1)),                              # b1
            resident((latent, ngh)),                         # W2
            resident((latent, 1)),                           # b2
        ],
        out_specs=pl.BlockSpec((latent, tm), lambda i: (0, i)),
        compiler_params=pltpu.CompilerParams(
            dimension_semantics=("parallel",)),
        cost_estimate=cost,
    )(noise, att, w1n, w1a, b1c, w2, b2c)

    # Kernel stores feature-major (latent, B_pad) for lane-dense stores;
    # return the PyTorch layout (B, latent).
    return out_t[:, :B].T


if __name__ == "__main__":
    # Small, module-consistent sizes: nz=8, attSize=8, ngh=32, latent_dim=16, B=8.
    nz, att_size, ngh, latent_dim, B = 8, 8, 32, 16, 8

    key = jax.random.PRNGKey(0)
    k_noise, k_att, k_w1, k_w2 = jax.random.split(key, 4)

    noise = jax.random.normal(k_noise, (B, nz), dtype=jnp.float32)
    att = jax.random.normal(k_att, (B, att_size), dtype=jnp.float32)

    # weights_init: Linear weight ~ N(0, 0.02), bias = 0. PyTorch layout (out, in).
    w1 = 0.02 * jax.random.normal(k_w1, (ngh, nz + att_size), dtype=jnp.float32)
    b1 = jnp.zeros((ngh,), dtype=jnp.float32)
    w2 = 0.02 * jax.random.normal(k_w2, (latent_dim, ngh), dtype=jnp.float32)
    b2 = jnp.zeros((latent_dim,), dtype=jnp.float32)

    out = pre_g_forward(noise, att, w1, b1, w2, b2)
    out = jax.block_until_ready(out)

    # Plain-JAX reference (high-precision matmuls) for a sanity check.
    x = jnp.concatenate([noise, att], axis=1)
    h = jnp.dot(x, w1.T, precision=lax.Precision.HIGHEST) + b1
    h = jnp.where(h > 0, h, 0.2 * h)
    ref = jnp.maximum(jnp.dot(h, w2.T, precision=lax.Precision.HIGHEST) + b2, 0.0)

    assert out.shape == (B, latent_dim)
    assert jnp.allclose(out, ref, atol=1e-4, rtol=1e-4)

    print("KERNEL_OK")
</pallas_src>

<mosaic_0001>
module attributes {stable_mosaic.version = 11 : i64} {
  func.func @pre_g_kernel(%arg0: i32, %arg1: memref<8x8xf32, #tpu.memory_space<vmem>>, %arg2: memref<8x8xf32, #tpu.memory_space<vmem>>, %arg3: memref<32x8xf32, #tpu.memory_space<vmem>>, %arg4: memref<32x8xf32, #tpu.memory_space<vmem>>, %arg5: memref<32x1xf32, #tpu.memory_space<vmem>>, %arg6: memref<16x32xf32, #tpu.memory_space<vmem>>, %arg7: memref<16x1xf32, #tpu.memory_space<vmem>>, %arg8: memref<16x8xf32, #tpu.memory_space<vmem>>) attributes {dimension_semantics = [#tpu.dimension_semantics<parallel>], iteration_bounds = array<i64: 1>, scalar_prefetch = 0 : i64, scratch_operands = 0 : i64, tpu.core_type = #tpu.core_type<tc>, window_params = [{transform_indices = @transform_0, window_bounds = array<i64: 8, 8>}, {transform_indices = @transform_1, window_bounds = array<i64: 8, 8>}, {pipeline_mode = #tpu.pipeline_mode<synchronous>, transform_indices = @transform_2, window_bounds = array<i64: 32, 8>}, {pipeline_mode = #tpu.pipeline_mode<synchronous>, transform_indices = @transform_3, window_bounds = array<i64: 32, 8>}, {pipeline_mode = #tpu.pipeline_mode<synchronous>, transform_indices = @transform_4, window_bounds = array<i64: 32, 1>}, {pipeline_mode = #tpu.pipeline_mode<synchronous>, transform_indices = @transform_5, window_bounds = array<i64: 16, 32>}, {pipeline_mode = #tpu.pipeline_mode<synchronous>, transform_indices = @transform_6, window_bounds = array<i64: 16, 1>}, {transform_indices = @transform_7, window_bounds = array<i64: 16, 8>}]} {
    %c0 = arith.constant 0 : index
    %c0_0 = arith.constant 0 : index
    %0 = vector.load %arg3[%c0, %c0_0] : memref<32x8xf32, #tpu.memory_space<vmem>>, vector<32x8xf32>
    %c0_1 = arith.constant 0 : index
    %c0_2 = arith.constant 0 : index
    %1 = vector.load %arg1[%c0_1, %c0_2] : memref<8x8xf32, #tpu.memory_space<vmem>>, vector<8x8xf32>
    %cst = arith.constant dense<0.000000e+00> : vector<32x8xf32>
    %2 = tpu.matmul %0, %1, %cst {dimension_numbers = #tpu.dot_dimension_numbers<[1], [1], [0], [0], [0, 0, 1, 0], [], []>} : vector<32x8xf32>, vector<8x8xf32>, vector<32x8xf32> -> vector<32x8xf32>
    %c0_3 = arith.constant 0 : index
    %c0_4 = arith.constant 0 : index
    %3 = vector.load %arg4[%c0_3, %c0_4] : memref<32x8xf32, #tpu.memory_space<vmem>>, vector<32x8xf32>
    %c0_5 = arith.constant 0 : index
    %c0_6 = arith.constant 0 : index
    %4 = vector.load %arg2[%c0_5, %c0_6] : memref<8x8xf32, #tpu.memory_space<vmem>>, vector<8x8xf32>
    %cst_7 = arith.constant dense<0.000000e+00> : vector<32x8xf32>
    %5 = tpu.matmul %3, %4, %cst_7 {dimension_numbers = #tpu.dot_dimension_numbers<[1], [1], [0], [0], [0, 0, 1, 0], [], []>} : vector<32x8xf32>, vector<8x8xf32>, vector<32x8xf32> -> vector<32x8xf32>
    %6 = arith.addf %2, %5 : vector<32x8xf32>
    %c0_8 = arith.constant 0 : index
    %c0_9 = arith.constant 0 : index
    %7 = vector.load %arg5[%c0_8, %c0_9] : memref<32x1xf32, #tpu.memory_space<vmem>>, vector<32x1xf32>
    %8 = vector.broadcast %7 : vector<32x1xf32> to vector<32x8xf32>
    %9 = arith.addf %6, %8 : vector<32x8xf32>
    %cst_10 = arith.constant 0.000000e+00 : f32
    %10 = vector.broadcast %cst_10 : f32 to vector<32x8xf32>
    %11 = arith.cmpf ogt, %9, %10 : vector<32x8xf32>
    %cst_11 = arith.constant 2.000000e-01 : f32
    %12 = vector.broadcast %cst_11 : f32 to vector<32x8xf32>
    %13 = arith.mulf %12, %9 : vector<32x8xf32>
    %14 = arith.select %11, %9, %13 : vector<32x8xi1>, vector<32x8xf32>
    %c0_12 = arith.constant 0 : index
    %c0_13 = arith.constant 0 : index
    %15 = vector.load %arg6[%c0_12, %c0_13] : memref<16x32xf32, #tpu.memory_space<vmem>>, vector<16x32xf32>
    %cst_14 = arith.constant dense<0.000000e+00> : vector<16x8xf32>
    %16 = tpu.matmul %15, %14, %cst_14 {dimension_numbers = #tpu.dot_dimension_numbers<[1], [0], [0], [1], [0, 0, 1, 1], [], []>} : vector<16x32xf32>, vector<32x8xf32>, vector<16x8xf32> -> vector<16x8xf32>
    %c0_15 = arith.constant 0 : index
    %c0_16 = arith.constant 0 : index
    %17 = vector.load %arg7[%c0_15, %c0_16] : memref<16x1xf32, #tpu.memory_space<vmem>>, vector<16x1xf32>
    %18 = vector.broadcast %17 : vector<16x1xf32> to vector<16x8xf32>
    %19 = arith.addf %16, %18 : vector<16x8xf32>
    %cst_17 = arith.constant 0.000000e+00 : f32
    %20 = vector.broadcast %cst_17 : f32 to vector<16x8xf32>
    %21 = arith.maximumf %19, %20 : vector<16x8xf32>
    %c0_18 = arith.constant 0 : index
    %c0_19 = arith.constant 0 : index
    %22 = vector.load %arg8[%c0_18, %c0_19] : memref<16x8xf32, #tpu.memory_space<vmem>>, vector<16x8xf32>
    tpu.vector_store %arg8[%c0_18, %c0_19], %21 {strides = array<i32>} : memref<16x8xf32, #tpu.memory_space<vmem>>, vector<16x8xf32>,
    return
  }
  func.func @transform_0(%arg0: i32) -> (i32, i32) {
    %c0_i32 = arith.constant 0 : i32
    %c0_i32_0 = arith.constant 0 : i32
    return %arg0, %c0_i32 : i32, i32
  }
  func.func @transform_1(%arg0: i32) -> (i32, i32) {
    %c0_i32 = arith.constant 0 : i32
    %c0_i32_0 = arith.constant 0 : i32
    return %arg0, %c0_i32 : i32, i32
  }
  func.func @transform_2(%arg0: i32) -> (i32, i32) {
    %c0_i32 = arith.constant 0 : i32
    %c0_i32_0 = arith.constant 0 : i32
    %c0_i32_1 = arith.constant 0 : i32
    return %c0_i32, %c0_i32_0 : i32, i32
  }
  func.func @transform_3(%arg0: i32) -> (i32, i32) {
    %c0_i32 = arith.constant 0 : i32
    %c0_i32_0 = arith.constant 0 : i32
    %c0_i32_1 = arith.constant 0 : i32
    return %c0_i32, %c0_i32_0 : i32, i32
  }
  func.func @transform_4(%arg0: i32) -> (i32, i32) {
    %c0_i32 = arith.constant 0 : i32
    %c0_i32_0 = arith.constant 0 : i32
    %c0_i32_1 = arith.constant 0 : i32
    return %c0_i32, %c0_i32_0 : i32, i32
  }
  func.func @transform_5(%arg0: i32) -> (i32, i32) {
    %c0_i32 = arith.constant 0 : i32
    %c0_i32_0 = arith.constant 0 : i32
    %c0_i32_1 = arith.constant 0 : i32
    return %c0_i32, %c0_i32_0 : i32, i32
  }
  func.func @transform_6(%arg0: i32) -> (i32, i32) {
    %c0_i32 = arith.constant 0 : i32
    %c0_i32_0 = arith.constant 0 : i32
    %c0_i32_1 = arith.constant 0 : i32
    return %c0_i32, %c0_i32_0 : i32, i32
  }
  func.func @transform_7(%arg0: i32) -> (i32, i32) {
    %c0_i32 = arith.constant 0 : i32
    %c0_i32_0 = arith.constant 0 : i32
    return %c0_i32, %arg0 : i32, i32
  }
}

</mosaic_0001>

<llo_original>
// kernel: tpu_custom_call.1
$region0: #{tpu_custom_call.1}
  #allocation0 [shape = 'u32[]', space=smem, size = 0x4, offset = 0x4, fixed_abs, tag = 'smem constant byte address 0x4 - core index']
  #allocation1 [shape = 'u32[144,128]{1,0:T(1,128)}', space=vmem, size = 0x12000, scoped, tag = 'internal scratch']
  %s0 = inlined_call_operand.vmem [shape: f32[8,8], index: 0, kind: input, shape index: {}]
  %s1 = inlined_call_operand.vmem [shape: f32[8,8], index: 1, kind: input, shape index: {}]
  %s2 = inlined_call_operand.vmem [shape: f32[32,8], index: 2, kind: input, shape index: {}]
  %s3 = inlined_call_operand.vmem [shape: f32[32,8], index: 3, kind: input, shape index: {}]
  %s4 = inlined_call_operand.vmem [shape: f32[32,1], index: 4, kind: input, shape index: {}]
  %s5 = inlined_call_operand.vmem [shape: f32[16,32], index: 5, kind: input, shape index: {}]
  %s6 = inlined_call_operand.vmem [shape: f32[16,1], index: 6, kind: input, shape index: {}]
  %s7 = inlined_call_operand.vmem [shape: f32[16,8], index: 7, kind: output, shape index: {}]
  %s8 = sld [smem:[#allocation0]]
  $region38: #{tpu_custom_call.1} parent=0
    _
  %s10 = ssub.s32 1, %s8
  %s11 = scalar_select 0, %s10, %s8
  // Predicated region
  $region2: #{tpu_custom_call.1} parent=0 // pred_check
    _
  $region3: #{tpu_custom_call.1} parent=0 // pred_check_branch
    %13 = sbr.rel (0) target = $region5
  $region4: #{tpu_custom_call.1} parent=0 // pred_region
    _
  $region5: #{tpu_custom_call.1} parent=0 // pred_fallthru
    _
  // Predicated region
  $region6: #{tpu_custom_call.1} parent=0 // pred_check
    _
  $region7: #{tpu_custom_call.1} parent=0 // pred_check_branch
    %15 = sbr.rel (0) target = $region9
  $region8: #{tpu_custom_call.1} parent=0 // pred_region
    _
  $region9: #{tpu_custom_call.1} parent=0 // pred_fallthru
    _
  // Predicated region
  $region10: #{tpu_custom_call.1} parent=0 // pred_check
    _
  $region11: #{tpu_custom_call.1} parent=0 // pred_check_branch
    %17 = sbr.rel (0) target = $region13
  $region12: #{tpu_custom_call.1} parent=0 // pred_region
    _
  $region13: #{tpu_custom_call.1} parent=0 // pred_fallthru
    _
  // Predicated region
  $region14: #{tpu_custom_call.1} parent=0 // pred_check
    _
  $region15: #{tpu_custom_call.1} parent=0 // pred_check_branch
    %19 = sbr.rel (0) target = $region17
  $region16: #{tpu_custom_call.1} parent=0 // pred_region
    _
  $region17: #{tpu_custom_call.1} parent=0 // pred_fallthru
    _
  // Predicated region
  $region18: #{tpu_custom_call.1} parent=0 // pred_check
    _
  $region19: #{tpu_custom_call.1} parent=0 // pred_check_branch
    %21 = sbr.rel (0) target = $region21
  $region20: #{tpu_custom_call.1} parent=0 // pred_region
    _
  $region21: #{tpu_custom_call.1} parent=0 // pred_fallthru
    _
  // Predicated region
  $region22: #{tpu_custom_call.1} parent=0 // pred_check
    _
  $region23: #{tpu_custom_call.1} parent=0 // pred_check_branch
    %23 = sbr.rel (0) target = $region25
  $region24: #{tpu_custom_call.1} parent=0 // pred_region
    _
  $region25: #{tpu_custom_call.1} parent=0 // pred_fallthru
    _
  // Predicated region
  $region26: #{tpu_custom_call.1} parent=0 // pred_check
    _
  $region27: #{tpu_custom_call.1} parent=0 // pred_check_branch
    %25 = sbr.rel (0) target = $region29
  $region28: #{tpu_custom_call.1} parent=0 // pred_region
    _
  $region29: #{tpu_custom_call.1} parent=0 // pred_fallthru
    _
  %v26 = vld [vmem:[%s2] sm:$0xff]
  %v27 = vld [vmem:[%s2 + $0x8] sm:$0xff]
  %v28 = vld [vmem:[%s2 + $0x10] sm:$0xff]
  %v29 = vld [vmem:[%s2 + $0x18] sm:$0xff]
  %v30 = vld [vmem:[%s0] sm:$0xff]
  %v31 = vld [vmem:[%s3] sm:$0xff]
  %v32 = vld [vmem:[%s3 + $0x8] sm:$0xff]
  %v33 = vld [vmem:[%s3 + $0x10] sm:$0xff]
  %v34 = vld [vmem:[%s3 + $0x18] sm:$0xff]
  %v35 = vld [vmem:[%s1] sm:$0xff]
  %vm36 = vcmask 64512
  %v38 = vsel %vm36, %v31, 0
  %v41 = vsel %vm36, %v32, 0
  %v44 = vsel %vm36, %v33, 0
  %v47 = vsel %vm36, %v34, 0
  %v50 = vsel %vm36, %v35, 0
  %52 = vmatprep.subr.mxu0 0.0
  %53 = vmatpush1.xpose.msra.mxu0 0.0
  %54 = vmatprep.subr.mxu0 0.0
  %55 = vmatpush1.xpose.msra.mxu0 0.0
  %56 = vmatprep.subr.mxu0 0.0
  %57 = vmatpush1.xpose.msra.mxu0 0.0
  %58 = vmatprep.subr.mxu0 0.0
  %59 = vmatpush1.xpose.msra.mxu0 0.0
  %60 = vmatprep.subr.mxu0 0.0
  %61 = vmatpush1.xpose.msra.mxu0 0.0
  %62 = vmatprep.subr.mxu0 0.0
  %63 = vmatpush1.xpose.msra.mxu0 0.0
  %64 = vmatprep.subr.mxu0 0.0
  %65 = vmatpush1.xpose.msra.mxu0 0.0
  %66 = vmatprep.subr.mxu0 0.0
  %67 = vmatpush1.xpose.msra.mxu0 0.0
  %68 = vmatprep.subr.mxu0 0.0
  %69 = vmatpush1.xpose.msra.mxu0 0.0
  %70 = vmatprep.subr.mxu0 0.0
  %71 = vmatpush1.xpose.msra.mxu0 0.0
  %72 = vmatprep.subr.mxu0 0.0
  %73 = vmatpush1.xpose.msra.mxu0 0.0
  %74 = vmatprep.subr.mxu0 0.0
  %75 = vmatpush1.xpose.msra.mxu0 0.0
  %76 = vmatprep.subr.mxu0 0.0
  %77 = vmatpush1.xpose.msra.mxu0 0.0
  %78 = vmatprep.subr.mxu0 0.0
  %79 = vmatpush1.xpose.msra.mxu0 0.0
  %80 = vmatprep.subr.mxu0 0.0
  %81 = vmatpush1.xpose.msra.mxu0 0.0
  %82 = vmatprep.subr.mxu0 0.0
  %83 = vmatpush1.xpose.msra.mxu0 %v50
  %84 = vmatprep.subr.mxu0 0.0
  %85 = vmatpush2.xpose.msra.mxu0 0.0
  %86 = vmatprep.subr.mxu0 0.0
  %87 = vmatpush2.xpose.msra.mxu0 0.0
  %88 = vmatprep.subr.mxu0 0.0
  %89 = vmatpush2.xpose.msra.mxu0 0.0
  %90 = vmatprep.subr.mxu0 0.0
  %91 = vmatpush2.xpose.msra.mxu0 0.0
  %92 = vmatprep.subr.mxu0 0.0
  %93 = vmatpush2.xpose.msra.mxu0 0.0
  %94 = vmatprep.subr.mxu0 0.0
  %95 = vmatpush2.xpose.msra.mxu0 0.0
  %96 = vmatprep.subr.mxu0 0.0
  %97 = vmatpush2.xpose.msra.mxu0 0.0
  %98 = vmatprep.subr.mxu0 0.0
  %99 = vmatpush2.xpose.msra.mxu0 0.0
  %100 = vmatprep.subr.mxu0 0.0
  %101 = vmatpush2.xpose.msra.mxu0 0.0
  %102 = vmatprep.subr.mxu0 0.0
  %103 = vmatpush2.xpose.msra.mxu0 0.0
  %104 = vmatprep.subr.mxu0 0.0
  %105 = vmatpush2.xpose.msra.mxu0 0.0
  %106 = vmatprep.subr.mxu0 0.0
  %107 = vmatpush2.xpose.msra.mxu0 0.0
  %108 = vmatprep.subr.mxu0 0.0
  %109 = vmatpush2.xpose.msra.mxu0 0.0
  %110 = vmatprep.subr.mxu0 0.0
  %111 = vmatpush2.xpose.msra.mxu0 0.0
  %112 = vmatprep.subr.mxu0 0.0
  %113 = vmatpush2.xpose.msra.mxu0 0.0
  %114 = vmatprep.subr.mxu0 0.0
  %115 = vmatpush2.xpose.msra.mxu0 0.0
  %116 = vmatprep.mubr.f32.mxu0 0.0
  %117 = vmatmul.mubr.f32.gmra.mxu0 %v38
  %v118 = vpop.f32.mrf.mxu0
  %v119 = vadd.f32 0.0, %v118
  %v120 = vpop.f32.mrf.mxu0
  %121 = vmatprep.mubr.f32.mxu0 0.0
  %122 = vmatmul.mubr.f32.gmra.mxu0 %v41
  %v123 = vpop.f32.mrf.mxu0
  %v124 = vadd.f32 0.0, %v123
  %v125 = vpop.f32.mrf.mxu0
  %126 = vmatprep.mubr.f32.mxu0 0.0
  %127 = vmatmul.mubr.f32.gmra.mxu0 %v44
  %v128 = vpop.f32.mrf.mxu0
  %v129 = vadd.f32 0.0, %v128
  %v130 = vpop.f32.mrf.mxu0
  %131 = vmatprep.mubr.f32.mxu0 0.0
  %132 = vmatmul.mubr.f32.gmra.mxu0 %v47
  %v133 = vpop.f32.mrf.mxu0
  %v134 = vadd.f32 0.0, %v133
  %v135 = vpop.f32.mrf.mxu0
  %136 = vdwg.mxu0
  %v138 = vsel %vm36, %v26, 0
  %v141 = vsel %vm36, %v27, 0
  %v144 = vsel %vm36, %v28, 0
  %v147 = vsel %vm36, %v29, 0
  %v150 = vsel %vm36, %v30, 0
  %152 = vmatprep.subr.mxu0 0.0
  %153 = vmatpush1.xpose.msra.mxu0 0.0
  %154 = vmatprep.subr.mxu0 0.0
  %155 = vmatpush1.xpose.msra.mxu0 0.0
  %156 = vmatprep.subr.mxu0 0.0
  %157 = vmatpush1.xpose.msra.mxu0 0.0
  %158 = vmatprep.subr.mxu0 0.0
  %159 = vmatpush1.xpose.msra.mxu0 0.0
  %160 = vmatprep.subr.mxu0 0.0
  %161 = vmatpush1.xpose.msra.mxu0 0.0
  %162 = vmatprep.subr.mxu0 0.0
  %163 = vmatpush1.xpose.msra.mxu0 0.0
  %164 = vmatprep.subr.mxu0 0.0
  %165 = vmatpush1.xpose.msra.mxu0 0.0
  %166 = vmatprep.subr.mxu0 0.0
  %167 = vmatpush1.xpose.msra.mxu0 0.0
  %168 = vmatprep.subr.mxu0 0.0
  %169 = vmatpush1.xpose.msra.mxu0 0.0
  %170 = vmatprep.subr.mxu0 0.0
  %171 = vmatpush1.xpose.msra.mxu0 0.0
  %172 = vmatprep.subr.mxu0 0.0
  %173 = vmatpush1.xpose.msra.mxu0 0.0
  %174 = vmatprep.subr.mxu0 0.0
  %175 = vmatpush1.xpose.msra.mxu0 0.0
  %176 = vmatprep.subr.mxu0 0.0
  %177 = vmatpush1.xpose.msra.mxu0 0.0
  %178 = vmatprep.subr.mxu0 0.0
  %179 = vmatpush1.xpose.msra.mxu0 0.0
  %180 = vmatprep.subr.mxu0 0.0
  %181 = vmatpush1.xpose.msra.mxu0 0.0
  %182 = vmatprep.subr.mxu0 0.0
  %183 = vmatpush1.xpose.msra.mxu0 %v150
  %184 = vmatprep.subr.mxu0 0.0
  %185 = vmatpush2.xpose.msra.mxu0 0.0
  %186 = vmatprep.subr.mxu0 0.0
  %187 = vmatpush2.xpose.msra.mxu0 0.0
  %188 = vmatprep.subr.mxu0 0.0
  %189 = vmatpush2.xpose.msra.mxu0 0.0
  %190 = vmatprep.subr.mxu0 0.0
  %191 = vmatpush2.xpose.msra.mxu0 0.0
  %192 = vmatprep.subr.mxu0 0.0
  %193 = vmatpush2.xpose.msra.mxu0 0.0
  %194 = vmatprep.subr.mxu0 0.0
  %195 = vmatpush2.xpose.msra.mxu0 0.0
  %196 = vmatprep.subr.mxu0 0.0
  %197 = vmatpush2.xpose.msra.mxu0 0.0
  %198 = vmatprep.subr.mxu0 0.0
  %199 = vmatpush2.xpose.msra.mxu0 0.0
  %200 = vmatprep.subr.mxu0 0.0
  %201 = vmatpush2.xpose.msra.mxu0 0.0
  %202 = vmatprep.subr.mxu0 0.0
  %203 = vmatpush2.xpose.msra.mxu0 0.0
  %204 = vmatprep.subr.mxu0 0.0
  %205 = vmatpush2.xpose.msra.mxu0 0.0
  %206 = vmatprep.subr.mxu0 0.0
  %207 = vmatpush2.xpose.msra.mxu0 0.0
  %208 = vmatprep.subr.mxu0 0.0
  %209 = vmatpush2.xpose.msra.mxu0 0.0
  %210 = vmatprep.subr.mxu0 0.0
  %211 = vmatpush2.xpose.msra.mxu0 0.0
  %212 = vmatprep.subr.mxu0 0.0
  %213 = vmatpush2.xpose.msra.mxu0 0.0
  %214 = vmatprep.subr.mxu0 0.0
  %215 = vmatpush2.xpose.msra.mxu0 0.0
  %216 = vmatprep.mubr.f32.mxu0 0.0
  %217 = vmatmul.mubr.f32.gmra.mxu0 %v138
  %v218 = vpop.f32.mrf.mxu0
  %v219 = vadd.f32 %v119, %v218
  %v220 = vpop.f32.mrf.mxu0
  %221 = vmatprep.mubr.f32.mxu0 0.0
  %222 = vmatmul.mubr.f32.gmra.mxu0 %v141
  %v223 = vpop.f32.mrf.mxu0
  %v224 = vadd.f32 %v124, %v223
  %v225 = vpop.f32.mrf.mxu0
  %226 = vmatprep.mubr.f32.mxu0 0.0
  %227 = vmatmul.mubr.f32.gmra.mxu0 %v144
  %v228 = vpop.f32.mrf.mxu0
  %v229 = vadd.f32 %v129, %v228
  %v230 = vpop.f32.mrf.mxu0
  %231 = vmatprep.mubr.f32.mxu0 0.0
  %232 = vmatmul.mubr.f32.gmra.mxu0 %v147
  %v233 = vpop.f32.mrf.mxu0
  %v234 = vadd.f32 %v134, %v233
  %v235 = vpop.f32.mrf.mxu0
  %236 = vdwg.mxu0
  %v237 = vld [vmem:[%s4] sm:$0xff]
  %v238 = vld [vmem:[%s4 + $0x8] sm:$0xff]
  %v239 = vld [vmem:[%s4 + $0x10] sm:$0xff]
  %v240 = vld [vmem:[%s4 + $0x18] sm:$0xff]
  %242 = vset.pattern.permute.xlu0 0
  %243 = vperm.xlu0 %242, %v237
  %v244 = vpop.permute.xlu0 %243
  %247 = vset.pattern.permute.xlu0 0
  %248 = vperm.xlu0 %247, %v238
  %v249 = vpop.permute.xlu0 %248
  %252 = vset.pattern.permute.xlu0 0
  %253 = vperm.xlu0 %252, %v239
  %v254 = vpop.permute.xlu0 %253
  %257 = vset.pattern.permute.xlu0 0
  %258 = vperm.xlu0 %257, %v240
  %v259 = vpop.permute.xlu0 %258
  %v261 = vadd.f32 %v219, %v244
  %v262 = vadd.f32 %v224, %v249
  %v263 = vadd.f32 %v229, %v254
  %v264 = vadd.f32 %v234, %v259
  %vm265 = vcmp.gt.f32.partialorder %v261, 0.0
  %vm266 = vcmp.gt.f32.partialorder %v262, 0.0
  %vm267 = vcmp.gt.f32.partialorder %v263, 0.0
  %vm268 = vcmp.gt.f32.partialorder %v264, 0.0
  %v269 = vmul.f32 %v261, 0.2
  %v270 = vmul.f32 %v262, 0.2
  %v271 = vmul.f32 %v263, 0.2
  %v272 = vmul.f32 %v264, 0.2
  %v273 = vsel %vm265, %v261, %v269
  %v274 = vsel %vm266, %v262, %v270
  %v275 = vsel %vm267, %v263, %v271
  %v276 = vsel %vm268, %v264, %v272
  %v277 = vld [vmem:[%s5] sm:$0xff]
  %v278 = vld [vmem:[%s5 + $0x8] sm:$0xff]
  %v279 = vld [vmem:[%s6] sm:$0xff]
  %v280 = vld [vmem:[%s6 + $0x8] sm:$0xff]
  %282 = vset.pattern.permute.xlu0 0
  %283 = vperm.xlu0 %282, %v279
  %v284 = vpop.permute.xlu0 %283
  %287 = vset.pattern.permute.xlu0 0
  %288 = vperm.xlu0 %287, %v280
  %v289 = vpop.permute.xlu0 %288
  %vm291 = vcmask 261120
  %v293 = vsel %vm291, %v277, 0
  %v296 = vsel %vm291, %v278, 0
  %298 = vmatprep.subr.mxu0 0.0
  %299 = vmatpush1.msra.mxu0 0.0
  %300 = vmatprep.subr.mxu0 0.0
  %301 = vmatpush1.msra.mxu0 0.0
  %302 = vmatprep.subr.mxu0 0.0
  %303 = vmatpush1.msra.mxu0 0.0
  %304 = vmatprep.subr.mxu0 0.0
  %305 = vmatpush1.msra.mxu0 0.0
  %306 = vmatprep.subr.mxu0 0.0
  %307 = vmatpush1.msra.mxu0 0.0
  %308 = vmatprep.subr.mxu0 0.0
  %309 = vmatpush1.msra.mxu0 0.0
  %310 = vmatprep.subr.mxu0 0.0
  %311 = vmatpush1.msra.mxu0 0.0
  %312 = vmatprep.subr.mxu0 0.0
  %313 = vmatpush1.msra.mxu0 0.0
  %314 = vmatprep.subr.mxu0 0.0
  %315 = vmatpush1.msra.mxu0 0.0
  %316 = vmatprep.subr.mxu0 0.0
  %317 = vmatpush1.msra.mxu0 0.0
  %318 = vmatprep.subr.mxu0 0.0
  %319 = vmatpush1.msra.mxu0 0.0
  %320 = vmatprep.subr.mxu0 0.0
  %321 = vmatpush1.msra.mxu0 0.0
  %322 = vmatprep.subr.mxu0 0.0
  %323 = vmatpush1.msra.mxu0 %v276
  %324 = vmatprep.subr.mxu0 0.0
  %325 = vmatpush1.msra.mxu0 %v275
  %326 = vmatprep.subr.mxu0 0.0
  %327 = vmatpush1.msra.mxu0 %v274
  %328 = vmatprep.subr.mxu0 0.0
  %329 = vmatpush1.msra.mxu0 %v273
  %330 = vmatprep.subr.mxu0 0.0
  %331 = vmatpush2.msra.mxu0 0.0
  %332 = vmatprep.subr.mxu0 0.0
  %333 = vmatpush2.msra.mxu0 0.0
  %334 = vmatprep.subr.mxu0 0.0
  %335 = vmatpush2.msra.mxu0 0.0
  %336 = vmatprep.subr.mxu0 0.0
  %337 = vmatpush2.msra.mxu0 0.0
  %338 = vmatprep.subr.mxu0 0.0
  %339 = vmatpush2.msra.mxu0 0.0
  %340 = vmatprep.subr.mxu0 0.0
  %341 = vmatpush2.msra.mxu0 0.0
  %342 = vmatprep.subr.mxu0 0.0
  %343 = vmatpush2.msra.mxu0 0.0
  %344 = vmatprep.subr.mxu0 0.0
  %345 = vmatpush2.msra.mxu0 0.0
  %346 = vmatprep.subr.mxu0 0.0
  %347 = vmatpush2.msra.mxu0 0.0
  %348 = vmatprep.subr.mxu0 0.0
  %349 = vmatpush2.msra.mxu0 0.0
  %350 = vmatprep.subr.mxu0 0.0
  %351 = vmatpush2.msra.mxu0 0.0
  %352 = vmatprep.subr.mxu0 0.0
  %353 = vmatpush2.msra.mxu0 0.0
  %354 = vmatprep.subr.mxu0 0.0
  %355 = vmatpush2.msra.mxu0 0.0
  %356 = vmatprep.subr.mxu0 0.0
  %357 = vmatpush2.msra.mxu0 0.0
  %358 = vmatprep.subr.mxu0 0.0
  %359 = vmatpush2.msra.mxu0 0.0
  %360 = vmatprep.subr.mxu0 0.0
  %361 = vmatpush2.msra.mxu0 0.0
  %362 = vmatprep.mubr.f32.mxu0 0.0
  %363 = vmatmul.mubr.f32.gmra.mxu0 %v293
  %v364 = vpop.f32.mrf.mxu0
  %v365 = vadd.f32 %v284, %v364
  %v366 = vpop.f32.mrf.mxu0
  %367 = vmatprep.mubr.f32.mxu0 0.0
  %368 = vmatmul.mubr.f32.gmra.mxu0 %v296
  %v369 = vpop.f32.mrf.mxu0
  %v370 = vadd.f32 %v289, %v369
  %v371 = vpop.f32.mrf.mxu0
  %372 = vdwg.mxu0
  %v373 = vmax.f32 %v365, 0.0
  %v374 = vmax.f32 %v370, 0.0
  %375 = vst.msk [vmem:[%s7] sm:$0xff] %vm36, %v373
  %376 = vst.msk [vmem:[%s7 + $0x8] sm:$0xff] %vm36, %v374
  // Predicated region
  $region30: #{tpu_custom_call.1} parent=0 // pred_check
    _
  $region31: #{tpu_custom_call.1} parent=0 // pred_check_branch
    %378 = sbr.rel (0) target = $region33
  $region32: #{tpu_custom_call.1} parent=0 // pred_region
    _
  $region33: #{tpu_custom_call.1} parent=0 // pred_fallthru
    _
  // Predicated region
  $region34: #{tpu_custom_call.1} parent=0 // pred_check
    _
  $region35: #{tpu_custom_call.1} parent=0 // pred_check_branch
    %380 = sbr.rel (0) target = $region37
  $region36: #{tpu_custom_call.1} parent=0 // pred_region
    _
  $region37: #{tpu_custom_call.1} parent=0 // pred_fallthru
    _

</llo_original>
